<compile_context>
chip_gen: v7x
topology: tpu7x:2x2x1
jax: 0.10.0
libtpu: 0.0.40
codegen_flags: <defaults>
</compile_context>

<pallas_src>
import jax
import jax.numpy as jnp
from jax.experimental import pallas as pl
from jax.experimental.pallas import tpu as pltpu


def _sinusoidal_kernel(t_ref, f_ref, out_ref):
    # t_ref:   (TB, 1)        current batch tile of timesteps (f32)
    # f_ref:   (1, half_dim)  precomputed frequency table (f32, same every tile)
    # out_ref: (TB, dim)      fused [sin | cos] output tile
    ang = t_ref[...] * f_ref[...]                                   # (TB, half_dim), VPU
    emb = jnp.concatenate([jnp.sin(ang), jnp.cos(ang)], axis=-1)    # EUP + lane concat
    out_ref[...] = emb.astype(out_ref.dtype)                        # single full-width store


def sinusoidal_position_embeddings(times, dim, *, out_dtype=jnp.float32,
                                   use_kernel=None):
    """times: (B,) array of diffusion timesteps. Returns (B, dim) embeddings."""
    assert dim % 2 == 0, "dim must be even (sin/cos halves)"
    B = times.shape[0]
    half_dim = dim // 2

    t_f32 = times.astype(jnp.float32)

    # Hoisted frequency table: half_dim unique exps, computed once by XLA
    # (kernel never touches exp, keeping the EUP slot for sin/cos only).
    scale = -(jnp.log(jnp.float32(1000.0)) / jnp.float32(half_dim))
    freqs = jnp.exp(jnp.arange(half_dim, dtype=jnp.float32) * scale)
    freqs = freqs.reshape(1, half_dim)

    # Small-problem bypass: a standalone pallas_call is pure launch/DMA
    # overhead for tiny shapes and blocks XLA from fusing into the consumer.
    if use_kernel is None:
        use_kernel = (B * dim) >= 65536
    if not use_kernel:
        ang = t_f32[:, None] * freqs
        return jnp.concatenate([jnp.sin(ang), jnp.cos(ang)], axis=-1).astype(out_dtype)

    # ---- Batch-tile sizing -------------------------------------------------
    # Byte budget per output tile (~2 MiB) amortizes the ~0.35 us per-grid-step
    # overhead while keeping the double-buffered VMEM footprint a few MiB
    # (safe under v7x's 32 MiB scoped limit).  Include the (TB,1) times block,
    # which pads to (TB,128) lanes (512 B/row) in VMEM.
    out_bytes_per_row = dim * jnp.dtype(out_dtype).itemsize
    times_pad_bytes_per_row = 512
    target_tile_bytes = 2 << 20
    tb = target_tile_bytes // (out_bytes_per_row + times_pad_bytes_per_row)
    tb = max(8, (tb // 8) * 8)
    # v7x megacore: guarantee >= 2 grid steps so both TensorCores get work.
    if B >= 16:
        half_b = -(-B // 2)                      # ceil(B / 2)
        tb = min(tb, ((half_b + 7) // 8) * 8)
    tb = min(tb, B)
    # tb is now either a multiple of 8 or equals B (full-array block) -> legal.
    grid = (pl.cdiv(B, tb),)

    t2 = t_f32.reshape(B, 1)

    out = pl.pallas_call(
        _sinusoidal_kernel,
        out_shape=jax.ShapeDtypeStruct((B, dim), out_dtype),
        grid=grid,
        in_specs=[
            pl.BlockSpec((tb, 1), lambda i: (i, 0)),          # times tile
            pl.BlockSpec((1, half_dim), lambda i: (0, 0)),    # shared freqs
        ],
        out_specs=pl.BlockSpec((tb, dim), lambda i: (i, 0)),  # fused [sin|cos] tile
        compiler_params=pltpu.CompilerParams(
            dimension_semantics=("parallel",)),               # v7x: shard batch over 2 TCs
    )(t2, freqs)
    return out


def _reference(times, dim):
    half_dim = dim // 2
    emb = jnp.exp(jnp.arange(half_dim, dtype=jnp.float32)
                  * -(jnp.log(jnp.float32(1000.0)) / half_dim))
    emb = times.astype(jnp.float32)[:, None] * emb[None, :]
    return jnp.concatenate([jnp.sin(emb), jnp.cos(emb)], axis=-1)


if __name__ == "__main__":
    key = jax.random.PRNGKey(0)

    # 1) Tiny shape -> bypass path (pure JAX, fuses into consumer).
    k1, k2, k3 = jax.random.split(key, 3)
    t_small = jax.random.uniform(k1, (8,), dtype=jnp.float32) * 1000.0
    out_small = jax.block_until_ready(sinusoidal_position_embeddings(t_small, 32))
    assert out_small.shape == (8, 32)
    assert jnp.allclose(out_small, _reference(t_small, 32), atol=1e-4, rtol=1e-4)

    # 2) Kernel path, small non-lane-aligned dim (half_dim=16 < 128).
    t_a = jax.random.uniform(k2, (64,), dtype=jnp.float32) * 1000.0
    out_a = jax.block_until_ready(
        sinusoidal_position_embeddings(t_a, 32, use_kernel=True))
    assert out_a.shape == (64, 32)
    assert jnp.allclose(out_a, _reference(t_a, 32), atol=1e-4, rtol=1e-4), \
        float(jnp.max(jnp.abs(out_a - _reference(t_a, 32))))

    # 3) Kernel path, lane-aligned dim (half_dim=128), >= 2 grid steps.
    t_b = jax.random.uniform(k3, (64,), dtype=jnp.float32) * 1000.0
    out_b = jax.block_until_ready(
        sinusoidal_position_embeddings(t_b, 256, use_kernel=True))
    assert out_b.shape == (64, 256)
    assert jnp.allclose(out_b, _reference(t_b, 256), atol=1e-4, rtol=1e-4), \
        float(jnp.max(jnp.abs(out_b - _reference(t_b, 256))))

    print("KERNEL_OK")
</pallas_src>

<mosaic_0001>
module attributes {stable_mosaic.version = 11 : i64} {
  func.func @_sinusoidal_kernel(%arg0: i32, %arg1: memref<32x1xf32, #tpu.memory_space<vmem>>, %arg2: memref<1x16xf32, #tpu.memory_space<vmem>>, %arg3: memref<32x32xf32, #tpu.memory_space<vmem>>) attributes {dimension_semantics = [#tpu.dimension_semantics<parallel>], iteration_bounds = array<i64: 2>, scalar_prefetch = 0 : i64, scratch_operands = 0 : i64, tpu.core_type = #tpu.core_type<tc>, window_params = [{transform_indices = @transform_0, window_bounds = array<i64: 32, 1>}, {pipeline_mode = #tpu.pipeline_mode<synchronous>, transform_indices = @transform_1, window_bounds = array<i64: 1, 16>}, {transform_indices = @transform_2, window_bounds = array<i64: 32, 32>}]} {
    %c0 = arith.constant 0 : index
    %c0_0 = arith.constant 0 : index
    %0 = vector.load %arg1[%c0, %c0_0] : memref<32x1xf32, #tpu.memory_space<vmem>>, vector<32x1xf32>
    %c0_1 = arith.constant 0 : index
    %c0_2 = arith.constant 0 : index
    %1 = vector.load %arg2[%c0_1, %c0_2] : memref<1x16xf32, #tpu.memory_space<vmem>>, vector<1x16xf32>
    %2 = vector.broadcast %0 : vector<32x1xf32> to vector<32x16xf32>
    %3 = vector.broadcast %1 : vector<1x16xf32> to vector<32x16xf32>
    %4 = arith.mulf %2, %3 : vector<32x16xf32>
    %5 = math.sin %4 : vector<32x16xf32>
    %6 = math.cos %4 : vector<32x16xf32>
    %7 = tpu.concatenate %5, %6 in 1 : vector<32x16xf32>, vector<32x16xf32> -> vector<32x32xf32>
    %c0_3 = arith.constant 0 : index
    %c0_4 = arith.constant 0 : index
    %8 = vector.load %arg3[%c0_3, %c0_4] : memref<32x32xf32, #tpu.memory_space<vmem>>, vector<32x32xf32>
    tpu.vector_store %arg3[%c0_3, %c0_4], %7 {strides = array<i32>} : memref<32x32xf32, #tpu.memory_space<vmem>>, vector<32x32xf32>,
    return
  }
  func.func @transform_0(%arg0: i32) -> (i32, i32) {
    %c0_i32 = arith.constant 0 : i32
    %c0_i32_0 = arith.constant 0 : i32
    return %arg0, %c0_i32 : i32, i32
  }
  func.func @transform_1(%arg0: i32) -> (i32, i32) {
    %c0_i32 = arith.constant 0 : i32
    %c0_i32_0 = arith.constant 0 : i32
    %c0_i32_1 = arith.constant 0 : i32
    return %c0_i32, %c0_i32_0 : i32, i32
  }
  func.func @transform_2(%arg0: i32) -> (i32, i32) {
    %c0_i32 = arith.constant 0 : i32
    %c0_i32_0 = arith.constant 0 : i32
    return %arg0, %c0_i32 : i32, i32
  }
}

</mosaic_0001>

<llo_original>
// kernel: tpu_custom_call.1
$region0: #{tpu_custom_call.1}
  #allocation0 [shape = 'u32[]', space=smem, size = 0x4, offset = 0x4, fixed_abs, tag = 'smem constant byte address 0x4 - core index']
  #allocation1 [shape = 'u32[144,128]{1,0:T(1,128)}', space=vmem, size = 0x12000, scoped, tag = 'internal scratch']
  %s0 = inlined_call_operand.vmem [shape: f32[64,1], index: 0, kind: input, shape index: {}]
  %s1 = inlined_call_operand.vmem [shape: f32[1,16], index: 1, kind: input, shape index: {}]
  %s2 = inlined_call_operand.vmem [shape: f32[64,32], index: 2, kind: output, shape index: {}]
  %s3 = sld [smem:[#allocation0]]
  $region41: #{tpu_custom_call.1} parent=0
    _
  %s5 = ssub.s32 1, %s3
  %s6 = scalar_select 0, %s5, %s3
  loop: start=0, step=1, limit=4
  $region2: #{tpu_custom_call.1} parent=0 // loop_pre_header
    _
  $region3: #{tpu_custom_call.1} parent=0 // loop_header
    %s8 = sphi 0, %s12
    %p9 = scmp.ge.s32.totalorder %s8, 4
    %s18 = sphi 0, %s20
    %s21 = sphi 0, %s18
    %s22 = sphi 0, %s21
    %s38 = sphi 0, %s22
    %s42 = sphi 0, %s42
    %s44 = sphi 0, %s42
    %s45 = sphi 0, %s44
    %s59 = sphi 0, %s45
    %s65 = sphi 0, %s67
    %s68 = sphi 0, %s65
    %s69 = sphi 0, %s68
    %s85 = sphi 0, %s69
  $region4: #{tpu_custom_call.1} parent=0 // loop_header_branch
    %11 = sbr.rel (%p9) target = $region8
  $region5: #{tpu_custom_call.1} parent=0 // loop_body
    %s13 = ssub.s32 %s8, 1
    %s14 = ssub.s32 %s8, 2
    %s15 = sadd.s32 %s8, 1
    %s16 = ssub.s32 %s8, %s15
    %p17 = scmp.eq.s32.totalorder %s16, 0
    %s19 = sadd.s32 %s18, 1
    %s20 = scalar_select %p17, %s18, %s19
    %p23 = pneg %p17
    %p24 = scmp.eq.s32.totalorder %s8, 1
    %p25 = por %p23, %p24
    %p26 = scmp.ne.s32.totalorder %s18, %s21
    %p27 = scmp.eq.s32.totalorder %s8, 0
    %p28 = por %p26, %p27
    %p29 = scmp.ne.s32.totalorder %s18, %s21
    %p30 = scmp.eq.s32.totalorder %s13, 1
    %p31 = por %p29, %p30
    %p32 = scmp.ne.s32.totalorder %s21, %s22
    %p33 = scmp.eq.s32.totalorder %s13, 0
    %p34 = por %p32, %p33
    %p35 = scmp.ne.s32.totalorder %s21, %s22
    %p36 = scmp.eq.s32.totalorder %s14, 1
    %p37 = por %p35, %p36
    %p39 = scmp.ne.s32.totalorder %s22, %s38
    %p40 = scmp.eq.s32.totalorder %s14, 0
    %p41 = por %p39, %p40
    %s43 = sadd.s32 %s42, 1
    %p46 = scmp.eq.s32.totalorder %s8, 1
    %p47 = scmp.ne.s32.totalorder %s42, %s44
    %p48 = scmp.eq.s32.totalorder %s8, 0
    %p49 = por %p47, %p48
    %p50 = scmp.ne.s32.totalorder %s42, %s44
    %p51 = scmp.eq.s32.totalorder %s13, 1
    %p52 = por %p50, %p51
    %p53 = scmp.ne.s32.totalorder %s44, %s45
    %p54 = scmp.eq.s32.totalorder %s13, 0
    %p55 = por %p53, %p54
    %p56 = scmp.ne.s32.totalorder %s44, %s45
    %p57 = scmp.eq.s32.totalorder %s14, 1
    %p58 = por %p56, %p57
    %p60 = scmp.ne.s32.totalorder %s45, %s59
    %p61 = scmp.eq.s32.totalorder %s14, 0
    %p62 = por %p60, %p61
    %s63 = ssub.s32 %s8, %s15
    %p64 = scmp.eq.s32.totalorder %s63, 0
    %s66 = sadd.s32 %s65, 1
    %s67 = scalar_select %p64, %s65, %s66
    %p70 = pneg %p64
    %p71 = scmp.eq.s32.totalorder %s8, 1
    %p72 = por %p70, %p71
    %p73 = scmp.ne.s32.totalorder %s65, %s68
    %p74 = scmp.eq.s32.totalorder %s8, 0
    %p75 = por %p73, %p74
    %p76 = scmp.ne.s32.totalorder %s65, %s68
    %p77 = scmp.eq.s32.totalorder %s13, 1
    %p78 = por %p76, %p77
    %p79 = scmp.ne.s32.totalorder %s68, %s69
    %p80 = scmp.eq.s32.totalorder %s13, 0
    %p81 = por %p79, %p80
    %p82 = scmp.ne.s32.totalorder %s68, %s69
    %p83 = scmp.eq.s32.totalorder %s14, 1
    %p84 = por %p82, %p83
    %p86 = scmp.ne.s32.totalorder %s69, %s85
    %p87 = scmp.eq.s32.totalorder %s14, 0
    %p88 = por %p86, %p87
    %p89 = scmp.le.s32.totalorder 1, %s8
    %p90 = scmp.lt.s32.totalorder %s8, 3
    %p91 = pnand %p89, %p90
    %p92 = pneg %p91
    // Predicated region
    $region9: #{tpu_custom_call.1} parent=5 // pred_check
      _
    $region10: #{tpu_custom_call.1} parent=5 // pred_check_branch
      %94 = sbr.rel (%p91) target = $region12
    $region11: #{tpu_custom_call.1} parent=5 // pred_region
      %s95 = ssub.s32 %s8, 1
      // Predicated region
      $region13: #{tpu_custom_call.1} parent=11 // pred_check
        %p96 = pneg %p55
      $region14: #{tpu_custom_call.1} parent=11 // pred_check_branch
        %98 = sbr.rel (%p96) target = $region16
      $region15: #{tpu_custom_call.1} parent=11 // pred_region
        _
      $region16: #{tpu_custom_call.1} parent=11 // pred_fallthru
        _
    $region12: #{tpu_custom_call.1} parent=5 // pred_fallthru
      _
    %p99 = scmp.lt.s32.totalorder %s8, 2
    // Predicated region
    $region17: #{tpu_custom_call.1} parent=5 // pred_check
      %p100 = pneg %p99
    $region18: #{tpu_custom_call.1} parent=5 // pred_check_branch
      %102 = sbr.rel (%p100) target = $region20
    $region19: #{tpu_custom_call.1} parent=5 // pred_region
      // Predicated region
      $region21: #{tpu_custom_call.1} parent=19 // pred_check
        %p103 = pneg %p28
      $region22: #{tpu_custom_call.1} parent=19 // pred_check_branch
        %105 = sbr.rel (%p103) target = $region24
      $region23: #{tpu_custom_call.1} parent=19 // pred_region
        %s106 = smul.u32 4, %s8
        %p107 = scmp.lt.s32.totalorder %s106, 7
        %s108 = scalar_select %p107, %s106, 7
        %s109 = smul.addr %s108, 8
        %s110 = scalar_lea.vmem %s0, %s109
        %s111 = smul.u32 4, %s8
      $region24: #{tpu_custom_call.1} parent=19 // pred_fallthru
        _
    $region20: #{tpu_custom_call.1} parent=5 // pred_fallthru
      _
    %p112 = scmp.le.s32.totalorder 1, %s8
    %p113 = scmp.lt.s32.totalorder %s8, 3
    %p114 = pnand %p112, %p113
    %p115 = pneg %p114
    // Predicated region
    $region25: #{tpu_custom_call.1} parent=5 // pred_check
      _
    $region26: #{tpu_custom_call.1} parent=5 // pred_check_branch
      %117 = sbr.rel (%p114) target = $region28
    $region27: #{tpu_custom_call.1} parent=5 // pred_region
      %s118 = ssub.s32 %s8, 1
      %s119 = smul.u32 4, %s13
      %p120 = scmp.lt.s32.totalorder %s119, 7
      %s121 = scalar_select %p120, %s119, 7
      %s122 = smul.addr %s121, 8
      %s123 = scalar_lea.vmem %s0, %s122
      %p124 = pneg %p34
      %p125 = pneg %p31
      %p126 = pneg %p55
      %p127 = pneg %p52
      %p128 = pneg %p81
      %p129 = pneg %p78
      %s130 = smul.u32 4, %s13
      %p131 = scmp.lt.s32.totalorder %s130, 7
      %s132 = scalar_select %p131, %s130, 7
      %s133 = smul.addr %s132, 8
      %s134 = scalar_lea.vmem %s2, %s133
      %s135 = smul.u32 4, %s13
      %p136 = scmp.lt.s32.totalorder %s135, 7
      %s137 = scalar_select %p136, %s135, 7
      %s138 = smul.addr %s137, 8
      %s139 = scalar_lea.vmem %s0, %s138
      %s140 = smul.u32 4, %s13
      %s141 = smul.u32 4, %s13
      %p142 = scmp.lt.s32.totalorder %s141, 7
      %s143 = scalar_select %p142, %s141, 7
      %s144 = smul.addr %s143, 8
      %s145 = scalar_lea.vmem %s2, %s144
      %s146 = smul.u32 4, %s13
      %v147 = vld [vmem:[%s139] sm:$0xff]
      %v148 = vld [vmem:[%s139 + $0x8] sm:$0xff]
      %v149 = vld [vmem:[%s139 + $0x10] sm:$0xff]
      %v150 = vld [vmem:[%s139 + $0x18] sm:$0xff]
      %v151 = vld [vmem:[%s1] sm:$0x1]
      %153 = vset.pattern.permute.xlu0 0
      %154 = vperm.xlu0 %153, %v147
      %v155 = vpop.permute.xlu0 %154
      %158 = vset.pattern.permute.xlu0 0
      %159 = vperm.xlu0 %158, %v148
      %v160 = vpop.permute.xlu0 %159
      %163 = vset.pattern.permute.xlu0 0
      %164 = vperm.xlu0 %163, %v149
      %v165 = vpop.permute.xlu0 %164
      %168 = vset.pattern.permute.xlu0 0
      %169 = vperm.xlu0 %168, %v150
      %v170 = vpop.permute.xlu0 %169
      %v173 = vlaneseq
      %v174 = vshrl.u32 %v173, 7
      %v175 = vsub.s32 0, %v174
      %v176 = vrot.slane %v151, %v175
      %v178 = vmul.f32 %v155, %v176
      %v179 = vmul.f32 %v160, %v176
      %v180 = vmul.f32 %v165, %v176
      %v181 = vmul.f32 %v170, %v176
      %v182 = vand.u32 2147483647, %v178
      %vm183 = vcmp.le.f32.partialorder %v182, 0.7853982
      %vm184 = vcmp.lt.s32.totalorder %v178, 0
      %v185 = vand.u32 %v178, 2139095040
      %v186 = vshrl.u32 %v185, 23
      %v187 = vsub.s32 %v186, 127
      %v188 = vand.u32 2147483647, %v178
      %v189 = vand.u32 %v188, 8388607
      %v190 = vor.u32 %v189, 8388608
      %v191 = vsub.s32 0, %v190
      %v192 = vadd.s32 %v187, 1
      %vm193 = vcmp.gt.s32.totalorder %v192, 0
      %v194 = vsel %vm193, %v192, 0
      %v195 = vshrl.u32 %v194, 5
      %v196 = vand.u32 %v194, 31
      %v197 = vsub.s32 32, %v196
      %v198 = vshrl.u32 683565275, %v197
      %v199 = vshll.u32 683565275, %v196
      %v200 = vshrl.u32 2475754826, %v197
      %v201 = vor.u32 %v199, %v200
      %v202 = vshll.u32 2475754826, %v196
      %v203 = vshrl.u32 2131351028, %v197
      %v204 = vor.u32 %v202, %v203
      %v205 = vshll.u32 2131351028, %v196
      %v206 = vshrl.u32 2102212464, %v197
      %v207 = vor.u32 %v205, %v206
      %v208 = vshll.u32 2102212464, %v196
      %v209 = vshrl.u32 920167782, %v197
      %v210 = vor.u32 %v208, %v209
      %v211 = vshll.u32 920167782, %v196
      %v212 = vshrl.u32 1326507024, %v197
      %v213 = vor.u32 %v211, %v212
      %vm214 = vcmp.lt.s32.totalorder %v195, 1
      %vm215 = vcmp.lt.s32.totalorder %v195, 2
      %vm216 = vcmp.lt.s32.totalorder %v195, 3
      %vm217 = vcmp.lt.s32.totalorder %v195, 4
      %v218 = vsel %vm214, %v198, %v201
      %v219 = vsel %vm217, %v207, 2102212464
      %v220 = vsel %vm216, %v204, %v219
      %v221 = vsel %vm215, %v218, %v220
      %v222 = vsel %vm214, %v201, %v204
      %v223 = vsel %vm217, %v210, 920167782
      %v224 = vsel %vm216, %v207, %v223
      %v225 = vsel %vm215, %v222, %v224
      %v226 = vsel %vm214, %v204, %v207
      %v227 = vsel %vm217, %v213, 1326507024
      %v228 = vsel %vm216, %v210, %v227
      %v229 = vsel %vm215, %v226, %v228
      %v230 = vshll.u32 %v190, 8
      %v231 = vmul.u32.u64.compose %v230, %v229
      %v232 = vextract.low.u32 %v231
      %v233 = vextract.high.u32 %v231
      %v234 = vmul.u32.u64.compose %v230, %v225
      %v235 = vextract.low.u32 %v234
      %v236 = vextract.high.u32 %v234
      %v237 = vmul.u32 %v230, %v221
      %v238 = vadd.s32 %v233, %v235
      %vm239 = vc.u32 %v233, %v235
      %v240 = vadd.s32 %v236, 1
      %v241 = vsel %vm239, %v240, %v236
      %v242 = vadd.s32 %v237, %v241
      %v243 = vadd.s32 %v242, 536870912
      %v244 = vshrl.u32 %v243, 30
      %v245 = vshll.u32 %v244, 30
      %v246 = vsub.s32 %v242, %v245
      %vm247 = vcmp.lt.s32.totalorder %v246, 0
      %v248 = vsub.s32 0, %v246
      %v249 = vsel %vm247, %v248, %v246
      %v250 = vclz %v249
      %v251 = vsub.s32 %v250, 2
      %vm252 = vcmp.gt.s32.totalorder 0, %v251
      %v253 = vsel %vm252, 0, %v251
      %v254 = vsub.s32 32, %v253
      %v255 = vshll.u32 %v246, %v253
      %v256 = vshrl.u32 %v238, %v254
      %v257 = vor.u32 %v255, %v256
      %v258 = vsub.s32 4294967266, %v253
      %v259 = vadd.s32 %v258, 127
      %v260 = vshll.u32 %v259, 23
      %v261 = vor.u32 4788187, %v260
      %v262 = vand.u32 2147483647, %v261
      %v264 = vcvt.s32.f32 %v257
      %v265 = vmul.f32 %v264, %v262
      %v266 = vxor.u32 %v265, 2147483648
      %v267 = vsel %vm184, %v266, %v265
      %v268 = vsub.s32 4, %v244
      %v269 = vsel %vm184, %v268, %v244
      %v270 = vsel %vm183, %v178, %v267
      %v271 = vsel %vm183, 0, %v269
      %v272 = vcosq.f32.pop %v270
      %v273 = vsinq.f32.pop %v270
      %vm274 = vweird.f32 %v178
      %v275 = vadd.s32 %v271, 3
      %v276 = vand.u32 %v275, 3
      %vm277 = vcmp.lt.s32.totalorder %v276, 2
      %vm278 = vcmp.eq.s32.totalorder %v276, 0
      %v279 = vxor.u32 %v273, 2147483648
      %v280 = vsel %vm278, %v272, %v279
      %vm281 = vcmp.eq.s32.totalorder %v276, 2
      %v282 = vxor.u32 %v272, 2147483648
      %v283 = vsel %vm281, %v282, %v273
      %v284 = vsel %vm277, %v280, %v283
      %v285 = vsel %vm274, nan, %v284
      %v286 = vand.u32 2147483647, %v179
      %vm287 = vcmp.le.f32.partialorder %v286, 0.7853982
      %vm288 = vcmp.lt.s32.totalorder %v179, 0
      %v289 = vand.u32 %v179, 2139095040
      %v290 = vshrl.u32 %v289, 23
      %v291 = vsub.s32 %v290, 127
      %v292 = vand.u32 2147483647, %v179
      %v293 = vand.u32 %v292, 8388607
      %v294 = vor.u32 %v293, 8388608
      %v295 = vsub.s32 0, %v294
      %v296 = vadd.s32 %v291, 1
      %vm297 = vcmp.gt.s32.totalorder %v296, 0
      %v298 = vsel %vm297, %v296, 0
      %v299 = vshrl.u32 %v298, 5
      %v300 = vand.u32 %v298, 31
      %v301 = vsub.s32 32, %v300
      %v302 = vshrl.u32 683565275, %v301
      %v303 = vshll.u32 683565275, %v300
      %v304 = vshrl.u32 2475754826, %v301
      %v305 = vor.u32 %v303, %v304
      %v306 = vshll.u32 2475754826, %v300
      %v307 = vshrl.u32 2131351028, %v301
      %v308 = vor.u32 %v306, %v307
      %v309 = vshll.u32 2131351028, %v300
      %v310 = vshrl.u32 2102212464, %v301
      %v311 = vor.u32 %v309, %v310
      %v312 = vshll.u32 2102212464, %v300
      %v313 = vshrl.u32 920167782, %v301
      %v314 = vor.u32 %v312, %v313
      %v315 = vshll.u32 920167782, %v300
      %v316 = vshrl.u32 1326507024, %v301
      %v317 = vor.u32 %v315, %v316
      %vm318 = vcmp.lt.s32.totalorder %v299, 1
      %vm319 = vcmp.lt.s32.totalorder %v299, 2
      %vm320 = vcmp.lt.s32.totalorder %v299, 3
      %vm321 = vcmp.lt.s32.totalorder %v299, 4
      %v322 = vsel %vm318, %v302, %v305
      %v323 = vsel %vm321, %v311, 2102212464
      %v324 = vsel %vm320, %v308, %v323
      %v325 = vsel %vm319, %v322, %v324
      %v326 = vsel %vm318, %v305, %v308
      %v327 = vsel %vm321, %v314, 920167782
      %v328 = vsel %vm320, %v311, %v327
      %v329 = vsel %vm319, %v326, %v328
      %v330 = vsel %vm318, %v308, %v311
      %v331 = vsel %vm321, %v317, 1326507024
      %v332 = vsel %vm320, %v314, %v331
      %v333 = vsel %vm319, %v330, %v332
      %v334 = vshll.u32 %v294, 8
      %v335 = vmul.u32.u64.compose %v334, %v333
      %v336 = vextract.low.u32 %v335
      %v337 = vextract.high.u32 %v335
      %v338 = vmul.u32.u64.compose %v334, %v329
      %v339 = vextract.low.u32 %v338
      %v340 = vextract.high.u32 %v338
      %v341 = vmul.u32 %v334, %v325
      %v342 = vadd.s32 %v337, %v339
      %vm343 = vc.u32 %v337, %v339
      %v344 = vadd.s32 %v340, 1
      %v345 = vsel %vm343, %v344, %v340
      %v346 = vadd.s32 %v341, %v345
      %v347 = vadd.s32 %v346, 536870912
      %v348 = vshrl.u32 %v347, 30
      %v349 = vshll.u32 %v348, 30
      %v350 = vsub.s32 %v346, %v349
      %vm351 = vcmp.lt.s32.totalorder %v350, 0
      %v352 = vsub.s32 0, %v350
      %v353 = vsel %vm351, %v352, %v350
      %v354 = vclz %v353
      %v355 = vsub.s32 %v354, 2
      %vm356 = vcmp.gt.s32.totalorder 0, %v355
      %v357 = vsel %vm356, 0, %v355
      %v358 = vsub.s32 32, %v357
      %v359 = vshll.u32 %v350, %v357
      %v360 = vshrl.u32 %v342, %v358
      %v361 = vor.u32 %v359, %v360
      %v362 = vsub.s32 4294967266, %v357
      %v363 = vadd.s32 %v362, 127
      %v364 = vshll.u32 %v363, 23
      %v365 = vor.u32 4788187, %v364
      %v366 = vand.u32 2147483647, %v365
      %v368 = vcvt.s32.f32 %v361
      %v369 = vmul.f32 %v368, %v366
      %v370 = vxor.u32 %v369, 2147483648
      %v371 = vsel %vm288, %v370, %v369
      %v372 = vsub.s32 4, %v348
      %v373 = vsel %vm288, %v372, %v348
      %v374 = vsel %vm287, %v179, %v371
      %v375 = vsel %vm287, 0, %v373
      %v376 = vcosq.f32.pop %v374
      %v377 = vsinq.f32.pop %v374
      %vm378 = vweird.f32 %v179
      %v379 = vadd.s32 %v375, 3
      %v380 = vand.u32 %v379, 3
      %vm381 = vcmp.lt.s32.totalorder %v380, 2
      %vm382 = vcmp.eq.s32.totalorder %v380, 0
      %v383 = vxor.u32 %v377, 2147483648
      %v384 = vsel %vm382, %v376, %v383
      %vm385 = vcmp.eq.s32.totalorder %v380, 2
      %v386 = vxor.u32 %v376, 2147483648
      %v387 = vsel %vm385, %v386, %v377
      %v388 = vsel %vm381, %v384, %v387
      %v389 = vsel %vm378, nan, %v388
      %v390 = vand.u32 2147483647, %v180
      %vm391 = vcmp.le.f32.partialorder %v390, 0.7853982
      %vm392 = vcmp.lt.s32.totalorder %v180, 0
      %v393 = vand.u32 %v180, 2139095040
      %v394 = vshrl.u32 %v393, 23
      %v395 = vsub.s32 %v394, 127
      %v396 = vand.u32 2147483647, %v180
      %v397 = vand.u32 %v396, 8388607
      %v398 = vor.u32 %v397, 8388608
      %v399 = vsub.s32 0, %v398
      %v400 = vadd.s32 %v395, 1
      %vm401 = vcmp.gt.s32.totalorder %v400, 0
      %v402 = vsel %vm401, %v400, 0
      %v403 = vshrl.u32 %v402, 5
      %v404 = vand.u32 %v402, 31
      %v405 = vsub.s32 32, %v404
      %v406 = vshrl.u32 683565275, %v405
      %v407 = vshll.u32 683565275, %v404
      %v408 = vshrl.u32 2475754826, %v405
      %v409 = vor.u32 %v407, %v408
      %v410 = vshll.u32 2475754826, %v404
      %v411 = vshrl.u32 2131351028, %v405
      %v412 = vor.u32 %v410, %v411
      %v413 = vshll.u32 2131351028, %v404
      %v414 = vshrl.u32 2102212464, %v405
      %v415 = vor.u32 %v413, %v414
      %v416 = vshll.u32 2102212464, %v404
      %v417 = vshrl.u32 920167782, %v405
      %v418 = vor.u32 %v416, %v417
      %v419 = vshll.u32 920167782, %v404
      %v420 = vshrl.u32 1326507024, %v405
      %v421 = vor.u32 %v419, %v420
      %vm422 = vcmp.lt.s32.totalorder %v403, 1
      %vm423 = vcmp.lt.s32.totalorder %v403, 2
      %vm424 = vcmp.lt.s32.totalorder %v403, 3
      %vm425 = vcmp.lt.s32.totalorder %v403, 4
      %v426 = vsel %vm422, %v406, %v409
      %v427 = vsel %vm425, %v415, 2102212464
      %v428 = vsel %vm424, %v412, %v427
      %v429 = vsel %vm423, %v426, %v428
      %v430 = vsel %vm422, %v409, %v412
      %v431 = vsel %vm425, %v418, 920167782
      %v432 = vsel %vm424, %v415, %v431
      %v433 = vsel %vm423, %v430, %v432
      %v434 = vsel %vm422, %v412, %v415
      %v435 = vsel %vm425, %v421, 1326507024
      %v436 = vsel %vm424, %v418, %v435
      %v437 = vsel %vm423, %v434, %v436
      %v438 = vshll.u32 %v398, 8
      %v439 = vmul.u32.u64.compose %v438, %v437
      %v440 = vextract.low.u32 %v439
      %v441 = vextract.high.u32 %v439
      %v442 = vmul.u32.u64.compose %v438, %v433
      %v443 = vextract.low.u32 %v442
      %v444 = vextract.high.u32 %v442
      %v445 = vmul.u32 %v438, %v429
      %v446 = vadd.s32 %v441, %v443
      %vm447 = vc.u32 %v441, %v443
      %v448 = vadd.s32 %v444, 1
      %v449 = vsel %vm447, %v448, %v444
      %v450 = vadd.s32 %v445, %v449
      %v451 = vadd.s32 %v450, 536870912
      %v452 = vshrl.u32 %v451, 30
      %v453 = vshll.u32 %v452, 30
      %v454 = vsub.s32 %v450, %v453
      %vm455 = vcmp.lt.s32.totalorder %v454, 0
      %v456 = vsub.s32 0, %v454
      %v457 = vsel %vm455, %v456, %v454
      %v458 = vclz %v457
      %v459 = vsub.s32 %v458, 2
      %vm460 = vcmp.gt.s32.totalorder 0, %v459
      %v461 = vsel %vm460, 0, %v459
      %v462 = vsub.s32 32, %v461
      %v463 = vshll.u32 %v454, %v461
      %v464 = vshrl.u32 %v446, %v462
      %v465 = vor.u32 %v463, %v464
      %v466 = vsub.s32 4294967266, %v461
      %v467 = vadd.s32 %v466, 127
      %v468 = vshll.u32 %v467, 23
      %v469 = vor.u32 4788187, %v468
      %v470 = vand.u32 2147483647, %v469
      %v472 = vcvt.s32.f32 %v465
      %v473 = vmul.f32 %v472, %v470
      %v474 = vxor.u32 %v473, 2147483648
      %v475 = vsel %vm392, %v474, %v473
      %v476 = vsub.s32 4, %v452
      %v477 = vsel %vm392, %v476, %v452
      %v478 = vsel %vm391, %v180, %v475
      %v479 = vsel %vm391, 0, %v477
      %v480 = vcosq.f32.pop %v478
      %v481 = vsinq.f32.pop %v478
      %vm482 = vweird.f32 %v180
      %v483 = vadd.s32 %v479, 3
      %v484 = vand.u32 %v483, 3
      %vm485 = vcmp.lt.s32.totalorder %v484, 2
      %vm486 = vcmp.eq.s32.totalorder %v484, 0
      %v487 = vxor.u32 %v481, 2147483648
      %v488 = vsel %vm486, %v480, %v487
      %vm489 = vcmp.eq.s32.totalorder %v484, 2
      %v490 = vxor.u32 %v480, 2147483648
      %v491 = vsel %vm489, %v490, %v481
      %v492 = vsel %vm485, %v488, %v491
      %v493 = vsel %vm482, nan, %v492
      %v494 = vand.u32 2147483647, %v181
      %vm495 = vcmp.le.f32.partialorder %v494, 0.7853982
      %vm496 = vcmp.lt.s32.totalorder %v181, 0
      %v497 = vand.u32 %v181, 2139095040
      %v498 = vshrl.u32 %v497, 23
      %v499 = vsub.s32 %v498, 127
      %v500 = vand.u32 2147483647, %v181
      %v501 = vand.u32 %v500, 8388607
      %v502 = vor.u32 %v501, 8388608
      %v503 = vsub.s32 0, %v502
      %v504 = vadd.s32 %v499, 1
      %vm505 = vcmp.gt.s32.totalorder %v504, 0
      %v506 = vsel %vm505, %v504, 0
      %v507 = vshrl.u32 %v506, 5
      %v508 = vand.u32 %v506, 31
      %v509 = vsub.s32 32, %v508
      %v510 = vshrl.u32 683565275, %v509
      %v511 = vshll.u32 683565275, %v508
      %v512 = vshrl.u32 2475754826, %v509
      %v513 = vor.u32 %v511, %v512
      %v514 = vshll.u32 2475754826, %v508
      %v515 = vshrl.u32 2131351028, %v509
      %v516 = vor.u32 %v514, %v515
      %v517 = vshll.u32 2131351028, %v508
      %v518 = vshrl.u32 2102212464, %v509
      %v519 = vor.u32 %v517, %v518
      %v520 = vshll.u32 2102212464, %v508
      %v521 = vshrl.u32 920167782, %v509
      %v522 = vor.u32 %v520, %v521
      %v523 = vshll.u32 920167782, %v508
      %v524 = vshrl.u32 1326507024, %v509
      %v525 = vor.u32 %v523, %v524
      %vm526 = vcmp.lt.s32.totalorder %v507, 1
      %vm527 = vcmp.lt.s32.totalorder %v507, 2
      %vm528 = vcmp.lt.s32.totalorder %v507, 3
      %vm529 = vcmp.lt.s32.totalorder %v507, 4
      %v530 = vsel %vm526, %v510, %v513
      %v531 = vsel %vm529, %v519, 2102212464
      %v532 = vsel %vm528, %v516, %v531
      %v533 = vsel %vm527, %v530, %v532
      %v534 = vsel %vm526, %v513, %v516
      %v535 = vsel %vm529, %v522, 920167782
      %v536 = vsel %vm528, %v519, %v535
      %v537 = vsel %vm527, %v534, %v536
      %v538 = vsel %vm526, %v516, %v519
      %v539 = vsel %vm529, %v525, 1326507024
      %v540 = vsel %vm528, %v522, %v539
      %v541 = vsel %vm527, %v538, %v540
      %v542 = vshll.u32 %v502, 8
      %v543 = vmul.u32.u64.compose %v542, %v541
      %v544 = vextract.low.u32 %v543
      %v545 = vextract.high.u32 %v543
      %v546 = vmul.u32.u64.compose %v542, %v537
      %v547 = vextract.low.u32 %v546
      %v548 = vextract.high.u32 %v546
      %v549 = vmul.u32 %v542, %v533
      %v550 = vadd.s32 %v545, %v547
      %vm551 = vc.u32 %v545, %v547
      %v552 = vadd.s32 %v548, 1
      %v553 = vsel %vm551, %v552, %v548
      %v554 = vadd.s32 %v549, %v553
      %v555 = vadd.s32 %v554, 536870912
      %v556 = vshrl.u32 %v555, 30
      %v557 = vshll.u32 %v556, 30
      %v558 = vsub.s32 %v554, %v557
      %vm559 = vcmp.lt.s32.totalorder %v558, 0
      %v560 = vsub.s32 0, %v558
      %v561 = vsel %vm559, %v560, %v558
      %v562 = vclz %v561
      %v563 = vsub.s32 %v562, 2
      %vm564 = vcmp.gt.s32.totalorder 0, %v563
      %v565 = vsel %vm564, 0, %v563
      %v566 = vsub.s32 32, %v565
      %v567 = vshll.u32 %v558, %v565
      %v568 = vshrl.u32 %v550, %v566
      %v569 = vor.u32 %v567, %v568
      %v570 = vsub.s32 4294967266, %v565
      %v571 = vadd.s32 %v570, 127
      %v572 = vshll.u32 %v571, 23
      %v573 = vor.u32 4788187, %v572
      %v574 = vand.u32 2147483647, %v573
      %v576 = vcvt.s32.f32 %v569
      %v577 = vmul.f32 %v576, %v574
      %v578 = vxor.u32 %v577, 2147483648
      %v579 = vsel %vm496, %v578, %v577
      %v580 = vsub.s32 4, %v556
      %v581 = vsel %vm496, %v580, %v556
      %v582 = vsel %vm495, %v181, %v579
      %v583 = vsel %vm495, 0, %v581
      %v584 = vcosq.f32.pop %v582
      %v585 = vsinq.f32.pop %v582
      %vm586 = vweird.f32 %v181
      %v587 = vadd.s32 %v583, 3
      %v588 = vand.u32 %v587, 3
      %vm589 = vcmp.lt.s32.totalorder %v588, 2
      %vm590 = vcmp.eq.s32.totalorder %v588, 0
      %v591 = vxor.u32 %v585, 2147483648
      %v592 = vsel %vm590, %v584, %v591
      %vm593 = vcmp.eq.s32.totalorder %v588, 2
      %v594 = vxor.u32 %v584, 2147483648
      %v595 = vsel %vm593, %v594, %v585
      %v596 = vsel %vm589, %v592, %v595
      %v597 = vsel %vm586, nan, %v596
      %v598 = vand.u32 2147483647, %v178
      %vm599 = vcmp.le.f32.partialorder %v598, 0.7853982
      %vm600 = vcmp.lt.s32.totalorder %v178, 0
      %v601 = vand.u32 %v178, 2139095040
      %v602 = vshrl.u32 %v601, 23
      %v603 = vsub.s32 %v602, 127
      %v604 = vand.u32 2147483647, %v178
      %v605 = vand.u32 %v604, 8388607
      %v606 = vor.u32 %v605, 8388608
      %v607 = vsub.s32 0, %v606
      %v608 = vadd.s32 %v603, 1
      %vm609 = vcmp.gt.s32.totalorder %v608, 0
      %v610 = vsel %vm609, %v608, 0
      %v611 = vshrl.u32 %v610, 5
      %v612 = vand.u32 %v610, 31
      %v613 = vsub.s32 32, %v612
      %v614 = vshrl.u32 683565275, %v613
      %v615 = vshll.u32 683565275, %v612
      %v616 = vshrl.u32 2475754826, %v613
      %v617 = vor.u32 %v615, %v616
      %v618 = vshll.u32 2475754826, %v612
      %v619 = vshrl.u32 2131351028, %v613
      %v620 = vor.u32 %v618, %v619
      %v621 = vshll.u32 2131351028, %v612
      %v622 = vshrl.u32 2102212464, %v613
      %v623 = vor.u32 %v621, %v622
      %v624 = vshll.u32 2102212464, %v612
      %v625 = vshrl.u32 920167782, %v613
      %v626 = vor.u32 %v624, %v625
      %v627 = vshll.u32 920167782, %v612
      %v628 = vshrl.u32 1326507024, %v613
      %v629 = vor.u32 %v627, %v628
      %vm630 = vcmp.lt.s32.totalorder %v611, 1
      %vm631 = vcmp.lt.s32.totalorder %v611, 2
      %vm632 = vcmp.lt.s32.totalorder %v611, 3
      %vm633 = vcmp.lt.s32.totalorder %v611, 4
      %v634 = vsel %vm630, %v614, %v617
      %v635 = vsel %vm633, %v623, 2102212464
      %v636 = vsel %vm632, %v620, %v635
      %v637 = vsel %vm631, %v634, %v636
      %v638 = vsel %vm630, %v617, %v620
      %v639 = vsel %vm633, %v626, 920167782
      %v640 = vsel %vm632, %v623, %v639
      %v641 = vsel %vm631, %v638, %v640
      %v642 = vsel %vm630, %v620, %v623
      %v643 = vsel %vm633, %v629, 1326507024
      %v644 = vsel %vm632, %v626, %v643
      %v645 = vsel %vm631, %v642, %v644
      %v646 = vshll.u32 %v606, 8
      %v647 = vmul.u32.u64.compose %v646, %v645
      %v648 = vextract.low.u32 %v647
      %v649 = vextract.high.u32 %v647
      %v650 = vmul.u32.u64.compose %v646, %v641
      %v651 = vextract.low.u32 %v650
      %v652 = vextract.high.u32 %v650
      %v653 = vmul.u32 %v646, %v637
      %v654 = vadd.s32 %v649, %v651
      %vm655 = vc.u32 %v649, %v651
      %v656 = vadd.s32 %v652, 1
      %v657 = vsel %vm655, %v656, %v652
      %v658 = vadd.s32 %v653, %v657
      %v659 = vadd.s32 %v658, 536870912
      %v660 = vshrl.u32 %v659, 30
      %v661 = vshll.u32 %v660, 30
      %v662 = vsub.s32 %v658, %v661
      %vm663 = vcmp.lt.s32.totalorder %v662, 0
      %v664 = vsub.s32 0, %v662
      %v665 = vsel %vm663, %v664, %v662
      %v666 = vclz %v665
      %v667 = vsub.s32 %v666, 2
      %vm668 = vcmp.gt.s32.totalorder 0, %v667
      %v669 = vsel %vm668, 0, %v667
      %v670 = vsub.s32 32, %v669
      %v671 = vshll.u32 %v662, %v669
      %v672 = vshrl.u32 %v654, %v670
      %v673 = vor.u32 %v671, %v672
      %v674 = vsub.s32 4294967266, %v669
      %v675 = vadd.s32 %v674, 127
      %v676 = vshll.u32 %v675, 23
      %v677 = vor.u32 4788187, %v676
      %v678 = vand.u32 2147483647, %v677
      %v680 = vcvt.s32.f32 %v673
      %v681 = vmul.f32 %v680, %v678
      %v682 = vxor.u32 %v681, 2147483648
      %v683 = vsel %vm600, %v682, %v681
      %v684 = vsub.s32 4, %v660
      %v685 = vsel %vm600, %v684, %v660
      %v686 = vsel %vm599, %v178, %v683
      %v687 = vsel %vm599, 0, %v685
      %v688 = vcosq.f32.pop %v686
      %v689 = vsinq.f32.pop %v686
      %vm690 = vweird.f32 %v178
      %v691 = vand.u32 %v687, 3
      %vm692 = vcmp.lt.s32.totalorder %v691, 2
      %vm693 = vcmp.eq.s32.totalorder %v691, 0
      %v694 = vxor.u32 %v689, 2147483648
      %v695 = vsel %vm693, %v688, %v694
      %vm696 = vcmp.eq.s32.totalorder %v691, 2
      %v697 = vxor.u32 %v688, 2147483648
      %v698 = vsel %vm696, %v697, %v689
      %v699 = vsel %vm692, %v695, %v698
      %v700 = vsel %vm690, nan, %v699
      %v701 = vand.u32 2147483647, %v179
      %vm702 = vcmp.le.f32.partialorder %v701, 0.7853982
      %vm703 = vcmp.lt.s32.totalorder %v179, 0
      %v704 = vand.u32 %v179, 2139095040
      %v705 = vshrl.u32 %v704, 23
      %v706 = vsub.s32 %v705, 127
      %v707 = vand.u32 2147483647, %v179
      %v708 = vand.u32 %v707, 8388607
      %v709 = vor.u32 %v708, 8388608
      %v710 = vsub.s32 0, %v709
      %v711 = vadd.s32 %v706, 1
      %vm712 = vcmp.gt.s32.totalorder %v711, 0
      %v713 = vsel %vm712, %v711, 0
      %v714 = vshrl.u32 %v713, 5
      %v715 = vand.u32 %v713, 31
      %v716 = vsub.s32 32, %v715
      %v717 = vshrl.u32 683565275, %v716
      %v718 = vshll.u32 683565275, %v715
      %v719 = vshrl.u32 2475754826, %v716
      %v720 = vor.u32 %v718, %v719
      %v721 = vshll.u32 2475754826, %v715
      %v722 = vshrl.u32 2131351028, %v716
      %v723 = vor.u32 %v721, %v722
      %v724 = vshll.u32 2131351028, %v715
      %v725 = vshrl.u32 2102212464, %v716
      %v726 = vor.u32 %v724, %v725
      %v727 = vshll.u32 2102212464, %v715
      %v728 = vshrl.u32 920167782, %v716
      %v729 = vor.u32 %v727, %v728
      %v730 = vshll.u32 920167782, %v715
      %v731 = vshrl.u32 1326507024, %v716
      %v732 = vor.u32 %v730, %v731
      %vm733 = vcmp.lt.s32.totalorder %v714, 1
      %vm734 = vcmp.lt.s32.totalorder %v714, 2
      %vm735 = vcmp.lt.s32.totalorder %v714, 3
      %vm736 = vcmp.lt.s32.totalorder %v714, 4
      %v737 = vsel %vm733, %v717, %v720
      %v738 = vsel %vm736, %v726, 2102212464
      %v739 = vsel %vm735, %v723, %v738
      %v740 = vsel %vm734, %v737, %v739
      %v741 = vsel %vm733, %v720, %v723
      %v742 = vsel %vm736, %v729, 920167782
      %v743 = vsel %vm735, %v726, %v742
      %v744 = vsel %vm734, %v741, %v743
      %v745 = vsel %vm733, %v723, %v726
      %v746 = vsel %vm736, %v732, 1326507024
      %v747 = vsel %vm735, %v729, %v746
      %v748 = vsel %vm734, %v745, %v747
      %v749 = vshll.u32 %v709, 8
      %v750 = vmul.u32.u64.compose %v749, %v748
      %v751 = vextract.low.u32 %v750
      %v752 = vextract.high.u32 %v750
      %v753 = vmul.u32.u64.compose %v749, %v744
      %v754 = vextract.low.u32 %v753
      %v755 = vextract.high.u32 %v753
      %v756 = vmul.u32 %v749, %v740
      %v757 = vadd.s32 %v752, %v754
      %vm758 = vc.u32 %v752, %v754
      %v759 = vadd.s32 %v755, 1
      %v760 = vsel %vm758, %v759, %v755
      %v761 = vadd.s32 %v756, %v760
      %v762 = vadd.s32 %v761, 536870912
      %v763 = vshrl.u32 %v762, 30
      %v764 = vshll.u32 %v763, 30
      %v765 = vsub.s32 %v761, %v764
      %vm766 = vcmp.lt.s32.totalorder %v765, 0
      %v767 = vsub.s32 0, %v765
      %v768 = vsel %vm766, %v767, %v765
      %v769 = vclz %v768
      %v770 = vsub.s32 %v769, 2
      %vm771 = vcmp.gt.s32.totalorder 0, %v770
      %v772 = vsel %vm771, 0, %v770
      %v773 = vsub.s32 32, %v772
      %v774 = vshll.u32 %v765, %v772
      %v775 = vshrl.u32 %v757, %v773
      %v776 = vor.u32 %v774, %v775
      %v777 = vsub.s32 4294967266, %v772
      %v778 = vadd.s32 %v777, 127
      %v779 = vshll.u32 %v778, 23
      %v780 = vor.u32 4788187, %v779
      %v781 = vand.u32 2147483647, %v780
      %v783 = vcvt.s32.f32 %v776
      %v784 = vmul.f32 %v783, %v781
      %v785 = vxor.u32 %v784, 2147483648
      %v786 = vsel %vm703, %v785, %v784
      %v787 = vsub.s32 4, %v763
      %v788 = vsel %vm703, %v787, %v763
      %v789 = vsel %vm702, %v179, %v786
      %v790 = vsel %vm702, 0, %v788
      %v791 = vcosq.f32.pop %v789
      %v792 = vsinq.f32.pop %v789
      %vm793 = vweird.f32 %v179
      %v794 = vand.u32 %v790, 3
      %vm795 = vcmp.lt.s32.totalorder %v794, 2
      %vm796 = vcmp.eq.s32.totalorder %v794, 0
      %v797 = vxor.u32 %v792, 2147483648
      %v798 = vsel %vm796, %v791, %v797
      %vm799 = vcmp.eq.s32.totalorder %v794, 2
      %v800 = vxor.u32 %v791, 2147483648
      %v801 = vsel %vm799, %v800, %v792
      %v802 = vsel %vm795, %v798, %v801
      %v803 = vsel %vm793, nan, %v802
      %v804 = vand.u32 2147483647, %v180
      %vm805 = vcmp.le.f32.partialorder %v804, 0.7853982
      %vm806 = vcmp.lt.s32.totalorder %v180, 0
      %v807 = vand.u32 %v180, 2139095040
      %v808 = vshrl.u32 %v807, 23
      %v809 = vsub.s32 %v808, 127
      %v810 = vand.u32 2147483647, %v180
      %v811 = vand.u32 %v810, 8388607
      %v812 = vor.u32 %v811, 8388608
      %v813 = vsub.s32 0, %v812
      %v814 = vadd.s32 %v809, 1
      %vm815 = vcmp.gt.s32.totalorder %v814, 0
      %v816 = vsel %vm815, %v814, 0
      %v817 = vshrl.u32 %v816, 5
      %v818 = vand.u32 %v816, 31
      %v819 = vsub.s32 32, %v818
      %v820 = vshrl.u32 683565275, %v819
      %v821 = vshll.u32 683565275, %v818
      %v822 = vshrl.u32 2475754826, %v819
      %v823 = vor.u32 %v821, %v822
      %v824 = vshll.u32 2475754826, %v818
      %v825 = vshrl.u32 2131351028, %v819
      %v826 = vor.u32 %v824, %v825
      %v827 = vshll.u32 2131351028, %v818
      %v828 = vshrl.u32 2102212464, %v819
      %v829 = vor.u32 %v827, %v828
      %v830 = vshll.u32 2102212464, %v818
      %v831 = vshrl.u32 920167782, %v819
      %v832 = vor.u32 %v830, %v831
      %v833 = vshll.u32 920167782, %v818
      %v834 = vshrl.u32 1326507024, %v819
      %v835 = vor.u32 %v833, %v834
      %vm836 = vcmp.lt.s32.totalorder %v817, 1
      %vm837 = vcmp.lt.s32.totalorder %v817, 2
      %vm838 = vcmp.lt.s32.totalorder %v817, 3
      %vm839 = vcmp.lt.s32.totalorder %v817, 4
      %v840 = vsel %vm836, %v820, %v823
      %v841 = vsel %vm839, %v829, 2102212464
      %v842 = vsel %vm838, %v826, %v841
      %v843 = vsel %vm837, %v840, %v842
      %v844 = vsel %vm836, %v823, %v826
      %v845 = vsel %vm839, %v832, 920167782
      %v846 = vsel %vm838, %v829, %v845
      %v847 = vsel %vm837, %v844, %v846
      %v848 = vsel %vm836, %v826, %v829
      %v849 = vsel %vm839, %v835, 1326507024
      %v850 = vsel %vm838, %v832, %v849
      %v851 = vsel %vm837, %v848, %v850
      %v852 = vshll.u32 %v812, 8
      %v853 = vmul.u32.u64.compose %v852, %v851
      %v854 = vextract.low.u32 %v853
      %v855 = vextract.high.u32 %v853
      %v856 = vmul.u32.u64.compose %v852, %v847
      %v857 = vextract.low.u32 %v856
      %v858 = vextract.high.u32 %v856
      %v859 = vmul.u32 %v852, %v843
      %v860 = vadd.s32 %v855, %v857
      %vm861 = vc.u32 %v855, %v857
      %v862 = vadd.s32 %v858, 1
      %v863 = vsel %vm861, %v862, %v858
      %v864 = vadd.s32 %v859, %v863
      %v865 = vadd.s32 %v864, 536870912
      %v866 = vshrl.u32 %v865, 30
      %v867 = vshll.u32 %v866, 30
      %v868 = vsub.s32 %v864, %v867
      %vm869 = vcmp.lt.s32.totalorder %v868, 0
      %v870 = vsub.s32 0, %v868
      %v871 = vsel %vm869, %v870, %v868
      %v872 = vclz %v871
      %v873 = vsub.s32 %v872, 2
      %vm874 = vcmp.gt.s32.totalorder 0, %v873
      %v875 = vsel %vm874, 0, %v873
      %v876 = vsub.s32 32, %v875
      %v877 = vshll.u32 %v868, %v875
      %v878 = vshrl.u32 %v860, %v876
      %v879 = vor.u32 %v877, %v878
      %v880 = vsub.s32 4294967266, %v875
      %v881 = vadd.s32 %v880, 127
      %v882 = vshll.u32 %v881, 23
      %v883 = vor.u32 4788187, %v882
      %v884 = vand.u32 2147483647, %v883
      %v886 = vcvt.s32.f32 %v879
      %v887 = vmul.f32 %v886, %v884
      %v888 = vxor.u32 %v887, 2147483648
      %v889 = vsel %vm806, %v888, %v887
      %v890 = vsub.s32 4, %v866
      %v891 = vsel %vm806, %v890, %v866
      %v892 = vsel %vm805, %v180, %v889
      %v893 = vsel %vm805, 0, %v891
      %v894 = vcosq.f32.pop %v892
      %v895 = vsinq.f32.pop %v892
      %vm896 = vweird.f32 %v180
      %v897 = vand.u32 %v893, 3
      %vm898 = vcmp.lt.s32.totalorder %v897, 2
      %vm899 = vcmp.eq.s32.totalorder %v897, 0
      %v900 = vxor.u32 %v895, 2147483648
      %v901 = vsel %vm899, %v894, %v900
      %vm902 = vcmp.eq.s32.totalorder %v897, 2
      %v903 = vxor.u32 %v894, 2147483648
      %v904 = vsel %vm902, %v903, %v895
      %v905 = vsel %vm898, %v901, %v904
      %v906 = vsel %vm896, nan, %v905
      %v907 = vand.u32 2147483647, %v181
      %vm908 = vcmp.le.f32.partialorder %v907, 0.7853982
      %vm909 = vcmp.lt.s32.totalorder %v181, 0
      %v910 = vand.u32 %v181, 2139095040
      %v911 = vshrl.u32 %v910, 23
      %v912 = vsub.s32 %v911, 127
      %v913 = vand.u32 2147483647, %v181
      %v914 = vand.u32 %v913, 8388607
      %v915 = vor.u32 %v914, 8388608
      %v916 = vsub.s32 0, %v915
      %v917 = vadd.s32 %v912, 1
      %vm918 = vcmp.gt.s32.totalorder %v917, 0
      %v919 = vsel %vm918, %v917, 0
      %v920 = vshrl.u32 %v919, 5
      %v921 = vand.u32 %v919, 31
      %v922 = vsub.s32 32, %v921
      %v923 = vshrl.u32 683565275, %v922
      %v924 = vshll.u32 683565275, %v921
      %v925 = vshrl.u32 2475754826, %v922
      %v926 = vor.u32 %v924, %v925
      %v927 = vshll.u32 2475754826, %v921
      %v928 = vshrl.u32 2131351028, %v922
      %v929 = vor.u32 %v927, %v928
      %v930 = vshll.u32 2131351028, %v921
      %v931 = vshrl.u32 2102212464, %v922
      %v932 = vor.u32 %v930, %v931
      %v933 = vshll.u32 2102212464, %v921
      %v934 = vshrl.u32 920167782, %v922
      %v935 = vor.u32 %v933, %v934
      %v936 = vshll.u32 920167782, %v921
      %v937 = vshrl.u32 1326507024, %v922
      %v938 = vor.u32 %v936, %v937
      %vm939 = vcmp.lt.s32.totalorder %v920, 1
      %vm940 = vcmp.lt.s32.totalorder %v920, 2
      %vm941 = vcmp.lt.s32.totalorder %v920, 3
      %vm942 = vcmp.lt.s32.totalorder %v920, 4
      %v943 = vsel %vm939, %v923, %v926
      %v944 = vsel %vm942, %v932, 2102212464
      %v945 = vsel %vm941, %v929, %v944
      %v946 = vsel %vm940, %v943, %v945
      %v947 = vsel %vm939, %v926, %v929
      %v948 = vsel %vm942, %v935, 920167782
      %v949 = vsel %vm941, %v932, %v948
      %v950 = vsel %vm940, %v947, %v949
      %v951 = vsel %vm939, %v929, %v932
      %v952 = vsel %vm942, %v938, 1326507024
      %v953 = vsel %vm941, %v935, %v952
      %v954 = vsel %vm940, %v951, %v953
      %v955 = vshll.u32 %v915, 8
      %v956 = vmul.u32.u64.compose %v955, %v954
      %v957 = vextract.low.u32 %v956
      %v958 = vextract.high.u32 %v956
      %v959 = vmul.u32.u64.compose %v955, %v950
      %v960 = vextract.low.u32 %v959
      %v961 = vextract.high.u32 %v959
      %v962 = vmul.u32 %v955, %v946
      %v963 = vadd.s32 %v958, %v960
      %vm964 = vc.u32 %v958, %v960
      %v965 = vadd.s32 %v961, 1
      %v966 = vsel %vm964, %v965, %v961
      %v967 = vadd.s32 %v962, %v966
      %v968 = vadd.s32 %v967, 536870912
      %v969 = vshrl.u32 %v968, 30
      %v970 = vshll.u32 %v969, 30
      %v971 = vsub.s32 %v967, %v970
      %vm972 = vcmp.lt.s32.totalorder %v971, 0
      %v973 = vsub.s32 0, %v971
      %v974 = vsel %vm972, %v973, %v971
      %v975 = vclz %v974
      %v976 = vsub.s32 %v975, 2
      %vm977 = vcmp.gt.s32.totalorder 0, %v976
      %v978 = vsel %vm977, 0, %v976
      %v979 = vsub.s32 32, %v978
      %v980 = vshll.u32 %v971, %v978
      %v981 = vshrl.u32 %v963, %v979
      %v982 = vor.u32 %v980, %v981
      %v983 = vsub.s32 4294967266, %v978
      %v984 = vadd.s32 %v983, 127
      %v985 = vshll.u32 %v984, 23
      %v986 = vor.u32 4788187, %v985
      %v987 = vand.u32 2147483647, %v986
      %v989 = vcvt.s32.f32 %v982
      %v990 = vmul.f32 %v989, %v987
      %v991 = vxor.u32 %v990, 2147483648
      %v992 = vsel %vm909, %v991, %v990
      %v993 = vsub.s32 4, %v969
      %v994 = vsel %vm909, %v993, %v969
      %v995 = vsel %vm908, %v181, %v992
      %v996 = vsel %vm908, 0, %v994
      %v997 = vcosq.f32.pop %v995
      %v998 = vsinq.f32.pop %v995
      %vm999 = vweird.f32 %v181
      %v1000 = vand.u32 %v996, 3
      %vm1001 = vcmp.lt.s32.totalorder %v1000, 2
      %vm1002 = vcmp.eq.s32.totalorder %v1000, 0
      %v1003 = vxor.u32 %v998, 2147483648
      %v1004 = vsel %vm1002, %v997, %v1003
      %vm1005 = vcmp.eq.s32.totalorder %v1000, 2
      %v1006 = vxor.u32 %v997, 2147483648
      %v1007 = vsel %vm1005, %v1006, %v998
      %v1008 = vsel %vm1001, %v1004, %v1007
      %v1009 = vsel %vm999, nan, %v1008
      %1014 = vrot.lane.b32.xlu0 %v700, 16
      %v1015 = vpop.permute.xlu0 %1014
      %1016 = vrot.lane.b32.xlu0 %v803, 16
      %v1017 = vpop.permute.xlu0 %1016
      %1018 = vrot.lane.b32.xlu0 %v906, 16
      %v1019 = vpop.permute.xlu0 %1018
      %1020 = vrot.lane.b32.xlu0 %v1009, 16
      %v1021 = vpop.permute.xlu0 %1020
      %vm1026 = vcmask 130048
      %v1027 = vsel %vm1026, %v285, %v1015
      %v1028 = vsel %vm1026, %v389, %v1017
      %v1029 = vsel %vm1026, %v493, %v1019
      %v1030 = vsel %vm1026, %v597, %v1021
      %vm1031 = vcmask 261120
      %1032 = vst.msk [vmem:[%s145] sm:$0xff] %vm1031, %v1027
      %1033 = vst.msk [vmem:[%s145 + $0x8] sm:$0xff] %vm1031, %v1028
      %1034 = vst.msk [vmem:[%s145 + $0x10] sm:$0xff] %vm1031, %v1029
      %1035 = vst.msk [vmem:[%s145 + $0x18] sm:$0xff] %vm1031, %v1030
      %s1036 = smul.u32 4, %s13
      %p1037 = scmp.lt.s32.totalorder %s1036, 7
      %s1038 = scalar_select %p1037, %s1036, 7
      %s1039 = smul.addr %s1038, 8
      %s1040 = scalar_lea.vmem %s2, %s1039
      // Predicated region
      $region29: #{tpu_custom_call.1} parent=27 // pred_check
        %p1041 = pneg %p78
      $region30: #{tpu_custom_call.1} parent=27 // pred_check_branch
        %1043 = sbr.rel (%p1041) target = $region32
      $region31: #{tpu_custom_call.1} parent=27 // pred_region
        %s1044 = smul.u32 4, %s13
      $region32: #{tpu_custom_call.1} parent=27 // pred_fallthru
        _
    $region28: #{tpu_custom_call.1} parent=5 // pred_fallthru
      _
    %p1045 = scmp.le.s32.totalorder 2, %s8
    // Predicated region
    $region33: #{tpu_custom_call.1} parent=5 // pred_check
      %p1046 = pneg %p1045
    $region34: #{tpu_custom_call.1} parent=5 // pred_check_branch
      %1048 = sbr.rel (%p1046) target = $region36
    $region35: #{tpu_custom_call.1} parent=5 // pred_region
      %s1049 = ssub.s32 %s8, 2
      // Predicated region
      $region37: #{tpu_custom_call.1} parent=35 // pred_check
        %p1050 = pneg %p84
      $region38: #{tpu_custom_call.1} parent=35 // pred_check_branch
        %1052 = sbr.rel (%p1050) target = $region40
      $region39: #{tpu_custom_call.1} parent=35 // pred_region
        %s1053 = smul.u32 4, %s14
        %p1054 = scmp.lt.s32.totalorder %s1053, 7
        %s1055 = scalar_select %p1054, %s1053, 7
        %s1056 = smul.addr %s1055, 8
        %s1057 = scalar_lea.vmem %s2, %s1056
      $region40: #{tpu_custom_call.1} parent=35 // pred_fallthru
        _
    $region36: #{tpu_custom_call.1} parent=5 // pred_fallthru
      _
  $region6: #{tpu_custom_call.1} parent=0 // loop_footer
    %s12 = sadd.s32 1, %s8
  $region7: #{tpu_custom_call.1} parent=0 // loop_footer_branch
    %7 = sbr.rel target = $region3
  $region8: #{tpu_custom_call.1} parent=0 // loop_exit
    _

</llo_original>
